<compile_context>
chip_gen: v5e
topology: v5e:2x2
jax: 0.10.0
libtpu: 0.0.40
codegen_flags: <defaults>
</compile_context>

<pallas_src>
import jax
import jax.numpy as jnp
from jax.experimental import pallas as pl
from jax.experimental.pallas import tpu as pltpu


def _round_up(x, m):
    return (x + m - 1) // m * m


def _mlp_edge_kernel(xs_ref, xd_ref, w1a_ref, w1b_ref, b1_ref, w2_ref, b2_ref,
                     out_ref):
    # xs_ref, xd_ref : (h, TE)   gathered node features, transposed (edges on lanes)
    # w1a_ref, w1b_ref: (h, h)   W1[:, :h], W1[:, h:]  (already left-multiply oriented)
    # b1_ref : (h, 1)            broadcast over lanes
    # w2_ref : (1, h)
    # b2_ref : (1, 1) scalar in SMEM
    # out_ref: (1, TE)           lane-dense score row
    h1 = jnp.dot(w1a_ref[...], xs_ref[...], preferred_element_type=jnp.float32)
    h1 = h1 + jnp.dot(w1b_ref[...], xd_ref[...],
                      preferred_element_type=jnp.float32)
    h1 = jnp.maximum(h1 + b1_ref[...], 0.0)                      # bias + ReLU (f32 VPU)
    s = jnp.dot(w2_ref[...], h1, preferred_element_type=jnp.float32)  # (1, TE)
    out_ref[...] = (s + b2_ref[0, 0]).astype(out_ref.dtype)


def mlp_predictor_forward(src, dst, h, params, *, tile_e=1024):
    """Edge scores for graph edges (src[i], dst[i]) given node features h.

    src, dst: (E,) int32 edge endpoints
    h:        (N, h_feats) float32 node features
    params:   dict with w1 (h, 2h), b1 (h,), w2 (1, h), b2 (1,)
    returns:  (E,) float32 edge scores
    """
    h_feats = h.shape[1]
    E = src.shape[0]

    # Pick a lane-dense edge tile and pad E to a multiple of it (padded edges
    # reuse node 0 and are discarded at the end).
    tile = min(tile_e, _round_up(max(E, 1), 128))
    e_pad = _round_up(E, tile)
    pad = e_pad - E
    src_p = jnp.pad(src, (0, pad))
    dst_p = jnp.pad(dst, (0, pad))

    # Gather in transposed layout: features on sublanes, edges on lanes.
    h_t = h.T                                   # (h, N)
    xs_t = jnp.take(h_t, src_p, axis=1)         # (h, E_pad)
    xd_t = jnp.take(h_t, dst_p, axis=1)         # (h, E_pad)

    # Weight prep (PyTorch convention: W1.weight is (h, 2h), W2.weight (1, h)).
    w1 = params["w1"]
    w1a = w1[:, :h_feats]                       # (h, h) — multiplies h[src]
    w1b = w1[:, h_feats:]                       # (h, h) — multiplies h[dst]
    b1 = params["b1"].reshape(h_feats, 1)       # (h, 1)
    w2 = params["w2"].reshape(1, h_feats)       # (1, h)
    b2 = params["b2"].reshape(1, 1)             # (1, 1) scalar → SMEM

    grid = (e_pad // tile,)
    out = pl.pallas_call(
        _mlp_edge_kernel,
        out_shape=jax.ShapeDtypeStruct((1, e_pad), jnp.float32),
        grid_spec=pltpu.PrefetchScalarGridSpec(
            num_scalar_prefetch=0,
            grid=grid,
            in_specs=[
                pl.BlockSpec((h_feats, tile), lambda i: (0, i)),      # h[src]^T tile
                pl.BlockSpec((h_feats, tile), lambda i: (0, i)),      # h[dst]^T tile
                pl.BlockSpec((h_feats, h_feats), lambda i: (0, 0)),   # W1a
                pl.BlockSpec((h_feats, h_feats), lambda i: (0, 0)),   # W1b
                pl.BlockSpec((h_feats, 1), lambda i: (0, 0)),         # b1
                pl.BlockSpec((1, h_feats), lambda i: (0, 0)),         # W2
                pl.BlockSpec(memory_space=pltpu.MemorySpace.SMEM),    # b2 scalar
            ],
            out_specs=pl.BlockSpec((1, tile), lambda i: (0, i)),
        ),
        compiler_params=pltpu.CompilerParams(
            dimension_semantics=("parallel",)),
    )(xs_t, xd_t, w1a, w1b, b1, w2, b2)
    return out[0, :E]


def init_params(key, h_feats):
    """Deterministic parameters matching nn.Linear(2h, h) and nn.Linear(h, 1)."""
    k1, k2, k3, k4 = jax.random.split(key, 4)
    lim1 = 1.0 / jnp.sqrt(2.0 * h_feats)
    lim2 = 1.0 / jnp.sqrt(float(h_feats))
    return {
        "w1": jax.random.uniform(k1, (h_feats, 2 * h_feats), jnp.float32, -lim1, lim1),
        "b1": jax.random.uniform(k2, (h_feats,), jnp.float32, -lim1, lim1),
        "w2": jax.random.uniform(k3, (1, h_feats), jnp.float32, -lim2, lim2),
        "b2": jax.random.uniform(k4, (1,), jnp.float32, -lim2, lim2),
    }


if __name__ == "__main__":
    key = jax.random.PRNGKey(0)
    h_feats = 32
    n_nodes = 16
    n_edges = 8

    k_h, k_src, k_dst, k_p = jax.random.split(key, 4)
    h = jax.random.normal(k_h, (n_nodes, h_feats), jnp.float32)
    src = jax.random.randint(k_src, (n_edges,), 0, n_nodes, jnp.int32)
    dst = jax.random.randint(k_dst, (n_edges,), 0, n_nodes, jnp.int32)
    params = init_params(k_p, h_feats)

    scores = mlp_predictor_forward(src, dst, h, params)
    jax.block_until_ready(scores)

    # Pure-JAX reference check of the same forward pass.
    x_ref = jnp.concatenate([h[src], h[dst]], axis=1)
    h1_ref = jnp.maximum(x_ref @ params["w1"].T + params["b1"], 0.0)
    ref = (h1_ref @ params["w2"].T + params["b2"])[:, 0]
    assert scores.shape == (n_edges,)
    assert jnp.allclose(scores, ref, atol=1e-5, rtol=1e-5), "mismatch vs reference"

    print("KERNEL_OK")
</pallas_src>

<mosaic_0001>
module attributes {stable_mosaic.version = 11 : i64} {
  func.func @_mlp_edge_kernel(%arg0: i32, %arg1: memref<32x128xf32, #tpu.memory_space<vmem>>, %arg2: memref<32x128xf32, #tpu.memory_space<vmem>>, %arg3: memref<32x32xf32, #tpu.memory_space<vmem>>, %arg4: memref<32x32xf32, #tpu.memory_space<vmem>>, %arg5: memref<32x1xf32, #tpu.memory_space<vmem>>, %arg6: memref<1x32xf32, #tpu.memory_space<vmem>>, %arg7: memref<1x1xf32, #tpu.memory_space<smem>>, %arg8: memref<1x128xf32, #tpu.memory_space<vmem>>) attributes {dimension_semantics = [#tpu.dimension_semantics<parallel>], iteration_bounds = array<i64: 1>, scalar_prefetch = 0 : i64, scratch_operands = 0 : i64, tpu.core_type = #tpu.core_type<tc>, window_params = [{transform_indices = @transform_0, window_bounds = array<i64: 32, 128>}, {transform_indices = @transform_1, window_bounds = array<i64: 32, 128>}, {pipeline_mode = #tpu.pipeline_mode<synchronous>, transform_indices = @transform_2, window_bounds = array<i64: 32, 32>}, {pipeline_mode = #tpu.pipeline_mode<synchronous>, transform_indices = @transform_3, window_bounds = array<i64: 32, 32>}, {pipeline_mode = #tpu.pipeline_mode<synchronous>, transform_indices = @transform_4, window_bounds = array<i64: 32, 1>}, {pipeline_mode = #tpu.pipeline_mode<synchronous>, transform_indices = @transform_5, window_bounds = array<i64: 1, 32>}, {transform_indices = @transform_6, window_bounds = array<i64: 1, 1>}, {transform_indices = @transform_7, window_bounds = array<i64: 1, 128>}]} {
    %c0 = arith.constant 0 : index
    %c0_0 = arith.constant 0 : index
    %0 = vector.load %arg3[%c0, %c0_0] : memref<32x32xf32, #tpu.memory_space<vmem>>, vector<32x32xf32>
    %c0_1 = arith.constant 0 : index
    %c0_2 = arith.constant 0 : index
    %1 = vector.load %arg1[%c0_1, %c0_2] : memref<32x128xf32, #tpu.memory_space<vmem>>, vector<32x128xf32>
    %cst = arith.constant dense<0.000000e+00> : vector<32x128xf32>
    %2 = tpu.matmul %0, %1, %cst {dimension_numbers = #tpu.dot_dimension_numbers<[1], [0], [0], [1], [0, 0, 1, 1], [], []>} : vector<32x32xf32>, vector<32x128xf32>, vector<32x128xf32> -> vector<32x128xf32>
    %c0_3 = arith.constant 0 : index
    %c0_4 = arith.constant 0 : index
    %3 = vector.load %arg4[%c0_3, %c0_4] : memref<32x32xf32, #tpu.memory_space<vmem>>, vector<32x32xf32>
    %c0_5 = arith.constant 0 : index
    %c0_6 = arith.constant 0 : index
    %4 = vector.load %arg2[%c0_5, %c0_6] : memref<32x128xf32, #tpu.memory_space<vmem>>, vector<32x128xf32>
    %cst_7 = arith.constant dense<0.000000e+00> : vector<32x128xf32>
    %5 = tpu.matmul %3, %4, %cst_7 {dimension_numbers = #tpu.dot_dimension_numbers<[1], [0], [0], [1], [0, 0, 1, 1], [], []>} : vector<32x32xf32>, vector<32x128xf32>, vector<32x128xf32> -> vector<32x128xf32>
    %6 = arith.addf %2, %5 : vector<32x128xf32>
    %c0_8 = arith.constant 0 : index
    %c0_9 = arith.constant 0 : index
    %7 = vector.load %arg5[%c0_8, %c0_9] : memref<32x1xf32, #tpu.memory_space<vmem>>, vector<32x1xf32>
    %8 = vector.broadcast %7 : vector<32x1xf32> to vector<32x128xf32>
    %9 = arith.addf %6, %8 : vector<32x128xf32>
    %cst_10 = arith.constant 0.000000e+00 : f32
    %10 = vector.broadcast %cst_10 : f32 to vector<32x128xf32>
    %11 = arith.maximumf %9, %10 : vector<32x128xf32>
    %c0_11 = arith.constant 0 : index
    %c0_12 = arith.constant 0 : index
    %12 = vector.load %arg6[%c0_11, %c0_12] : memref<1x32xf32, #tpu.memory_space<vmem>>, vector<1x32xf32>
    %cst_13 = arith.constant dense<0.000000e+00> : vector<1x128xf32>
    %13 = tpu.matmul %12, %11, %cst_13 {dimension_numbers = #tpu.dot_dimension_numbers<[1], [0], [0], [1], [0, 0, 1, 1], [], []>} : vector<1x32xf32>, vector<32x128xf32>, vector<1x128xf32> -> vector<1x128xf32>
    %c0_14 = arith.constant 0 : index
    %c0_15 = arith.constant 0 : index
    %14 = memref.load %arg7[%c0_14, %c0_15] : memref<1x1xf32, #tpu.memory_space<smem>>
    %15 = vector.broadcast %14 : f32 to vector<1x128xf32>
    %16 = arith.addf %13, %15 : vector<1x128xf32>
    %c0_16 = arith.constant 0 : index
    %c0_17 = arith.constant 0 : index
    %17 = vector.load %arg8[%c0_16, %c0_17] : memref<1x128xf32, #tpu.memory_space<vmem>>, vector<1x128xf32>
    tpu.vector_store %arg8[%c0_16, %c0_17], %16 {strides = array<i32>} : memref<1x128xf32, #tpu.memory_space<vmem>>, vector<1x128xf32>,
    return
  }
  func.func @transform_0(%arg0: i32) -> (i32, i32) {
    %c0_i32 = arith.constant 0 : i32
    %c0_i32_0 = arith.constant 0 : i32
    return %c0_i32, %arg0 : i32, i32
  }
  func.func @transform_1(%arg0: i32) -> (i32, i32) {
    %c0_i32 = arith.constant 0 : i32
    %c0_i32_0 = arith.constant 0 : i32
    return %c0_i32, %arg0 : i32, i32
  }
  func.func @transform_2(%arg0: i32) -> (i32, i32) {
    %c0_i32 = arith.constant 0 : i32
    %c0_i32_0 = arith.constant 0 : i32
    %c0_i32_1 = arith.constant 0 : i32
    return %c0_i32, %c0_i32_0 : i32, i32
  }
  func.func @transform_3(%arg0: i32) -> (i32, i32) {
    %c0_i32 = arith.constant 0 : i32
    %c0_i32_0 = arith.constant 0 : i32
    %c0_i32_1 = arith.constant 0 : i32
    return %c0_i32, %c0_i32_0 : i32, i32
  }
  func.func @transform_4(%arg0: i32) -> (i32, i32) {
    %c0_i32 = arith.constant 0 : i32
    %c0_i32_0 = arith.constant 0 : i32
    %c0_i32_1 = arith.constant 0 : i32
    return %c0_i32, %c0_i32_0 : i32, i32
  }
  func.func @transform_5(%arg0: i32) -> (i32, i32) {
    %c0_i32 = arith.constant 0 : i32
    %c0_i32_0 = arith.constant 0 : i32
    %c0_i32_1 = arith.constant 0 : i32
    return %c0_i32, %c0_i32_0 : i32, i32
  }
  func.func @transform_6(%arg0: i32) -> (i32, i32) {
    %c0_i32 = arith.constant 0 : i32
    %c0_i32_0 = arith.constant 0 : i32
    %c0_i32_1 = arith.constant 0 : i32
    return %c0_i32, %c0_i32_0 : i32, i32
  }
  func.func @transform_7(%arg0: i32) -> (i32, i32) {
    %c0_i32 = arith.constant 0 : i32
    %c0_i32_0 = arith.constant 0 : i32
    return %c0_i32, %arg0 : i32, i32
  }
}

</mosaic_0001>

<llo_original>
// kernel: tpu_custom_call.1
$region0: #{tpu_custom_call.1}
  #allocation0 [shape = 'u32[]', space=smem, size = 0x4, offset = 0x4, fixed_abs, tag = 'smem constant byte address 0x4 - core index']
  #allocation1 [shape = 'u32[72,128]{1,0:T(1,128)}', space=vmem, size = 0x9000, scoped, tag = 'internal scratch']
  #allocation2 [shape = 'f32[1,1]{1,0:T(1,128)S(6)}', space=smem, size = 0x200, scoped, tag = 'scoped memory for tpu_custom_call.1']
  %s0 = inlined_call_operand.vmem [shape: f32[32,128], index: 0, kind: input, shape index: {}]
  %s1 = inlined_call_operand.hbm [shape: f32[32,128], index: 1, kind: input, shape index: {}]
  %s2 = inlined_call_operand.hbm [shape: f32[32,32], index: 2, kind: input, shape index: {}]
  %s3 = inlined_call_operand.hbm [shape: f32[32,32], index: 3, kind: input, shape index: {}]
  %s4 = inlined_call_operand.vmem [shape: f32[32,1], index: 4, kind: input, shape index: {}]
  %s5 = inlined_call_operand.vmem [shape: f32[1,32], index: 5, kind: input, shape index: {}]
  %s6 = inlined_call_operand.<no memory space> [shape: f32[1,1], index: 6, kind: input, shape index: {}]
  %s7 = inlined_call_operand.hbm [shape: f32[1,128], index: 7, kind: output, shape index: {}]
  %s8 = sld [smem:[#allocation0]]
  $region50: #{tpu_custom_call.1} parent=0
    _
  %s10 = ssub.s32 1, %s8
  %s11 = scalar_select 0, %s10, %s8
  %12 = sst [smem:[#allocation2]] %s6
  $region1: #{tpu_custom_call.1} parent=0
    #allocation3 [shape = 'u8[16384]{0}', space=vmem, size = 0x4000, scoped, tag = 'input window, operand 1, single buffered']
    #allocation4 [shape = 's32[1]{0}', space=sflag, size = 0x4, scoped, tag = 'scoped memory for tpu_custom_call.1']
    #allocation5 [shape = 's32[1]{0}', space=sflag, size = 0x4, scoped, tag = 'scoped memory for tpu_custom_call.1']
    #allocation6 [shape = 'u8[16384]{0}', space=vmem, size = 0x4000, scoped, tag = 'input window, operand 2, single buffered']
    #allocation7 [shape = 's32[1]{0}', space=sflag, size = 0x4, scoped, tag = 'scoped memory for tpu_custom_call.1']
    #allocation8 [shape = 'u8[16384]{0}', space=vmem, size = 0x4000, scoped, tag = 'input window, operand 3, single buffered']
    #allocation9 [shape = 'u8[512]{0}', space=vmem, size = 0x400, scoped, tag = 'output window, operand 0, single buffered']
    %13 = vsyncpa [#allocation4], 0
    %14 = vsyncpa [#allocation7], 0
    %15 = vsyncpa [#allocation5], 0
    // Predicated region
    $region2: #{tpu_custom_call.1} parent=1 // pred_check
      _
    $region3: #{tpu_custom_call.1} parent=1 // pred_check_branch
      %17 = sbr.rel (0) target = $region5
    $region4: #{tpu_custom_call.1} parent=1 // pred_region
      _
    $region5: #{tpu_custom_call.1} parent=1 // pred_fallthru
      _
    // Predicated region
    $region6: #{tpu_custom_call.1} parent=1 // pred_check
      _
    $region7: #{tpu_custom_call.1} parent=1 // pred_check_branch
      %19 = sbr.rel (0) target = $region9
    $region8: #{tpu_custom_call.1} parent=1 // pred_region
      %21 = vsyncadd [#allocation4], 0
      %s22 = sshll.u32 %s1, 4
      %s23 = int_to_ptr.hbm [resolvable:$true] %s22
      %s24 = sshll.u32 [#allocation3], 4
      %s25 = int_to_ptr.vmem [resolvable:$true] %s24
      %30 = dma.hbm_to_vmem [thread:$0]  %s23, 512, %s25, [#allocation4], 128, 128, 8
    $region9: #{tpu_custom_call.1} parent=1 // pred_fallthru
      _
    // Predicated region
    $region10: #{tpu_custom_call.1} parent=1 // pred_check
      _
    $region11: #{tpu_custom_call.1} parent=1 // pred_check_branch
      %32 = sbr.rel (0) target = $region13
    $region12: #{tpu_custom_call.1} parent=1 // pred_region
      %34 = vsyncadd [#allocation7], 0
      %s35 = sshll.u32 %s2, 4
      %s36 = int_to_ptr.hbm [resolvable:$true] %s35
      %s37 = sshll.u32 [#allocation6], 4
      %s38 = int_to_ptr.vmem [resolvable:$true] %s37
      %43 = dma.hbm_to_vmem [thread:$0]  %s36, 512, %s38, [#allocation7], 128, 128, 8
    $region13: #{tpu_custom_call.1} parent=1 // pred_fallthru
      _
    // Predicated region
    $region14: #{tpu_custom_call.1} parent=1 // pred_check
      _
    $region15: #{tpu_custom_call.1} parent=1 // pred_check_branch
      %45 = sbr.rel (0) target = $region17
    $region16: #{tpu_custom_call.1} parent=1 // pred_region
      %47 = vsyncadd [#allocation7], 0
      %s48 = sshll.u32 %s3, 4
      %s49 = int_to_ptr.hbm [resolvable:$true] %s48
      %s50 = sshll.u32 [#allocation8], 4
      %s51 = int_to_ptr.vmem [resolvable:$true] %s50
      %56 = dma.hbm_to_vmem [thread:$0]  %s49, 512, %s51, [#allocation7], 128, 128, 8
    $region17: #{tpu_custom_call.1} parent=1 // pred_fallthru
      _
    // Predicated region
    $region18: #{tpu_custom_call.1} parent=1 // pred_check
      _
    $region19: #{tpu_custom_call.1} parent=1 // pred_check_branch
      %58 = sbr.rel (0) target = $region21
    $region20: #{tpu_custom_call.1} parent=1 // pred_region
      _
    $region21: #{tpu_custom_call.1} parent=1 // pred_fallthru
      _
    // Predicated region
    $region22: #{tpu_custom_call.1} parent=1 // pred_check
      _
    $region23: #{tpu_custom_call.1} parent=1 // pred_check_branch
      %60 = sbr.rel (0) target = $region25
    $region24: #{tpu_custom_call.1} parent=1 // pred_region
      _
    $region25: #{tpu_custom_call.1} parent=1 // pred_fallthru
      _
    // Predicated region
    $region26: #{tpu_custom_call.1} parent=1 // pred_check
      _
    $region27: #{tpu_custom_call.1} parent=1 // pred_check_branch
      %62 = sbr.rel (0) target = $region29
    $region28: #{tpu_custom_call.1} parent=1 // pred_region
      _
    $region29: #{tpu_custom_call.1} parent=1 // pred_fallthru
      _
    // Predicated region
    $region30: #{tpu_custom_call.1} parent=1 // pred_check
      _
    $region31: #{tpu_custom_call.1} parent=1 // pred_check_branch
      %64 = sbr.rel (0) target = $region33
    $region32: #{tpu_custom_call.1} parent=1 // pred_region
      %66 = dma.done [#allocation4], 512
    $region33: #{tpu_custom_call.1} parent=1 // pred_fallthru
      _
    // Predicated region
    $region34: #{tpu_custom_call.1} parent=1 // pred_check
      _
    $region35: #{tpu_custom_call.1} parent=1 // pred_check_branch
      %68 = sbr.rel (0) target = $region37
    $region36: #{tpu_custom_call.1} parent=1 // pred_region
      %70 = dma.done [#allocation7], 512
    $region37: #{tpu_custom_call.1} parent=1 // pred_fallthru
      _
    // Predicated region
    $region38: #{tpu_custom_call.1} parent=1 // pred_check
      _
    $region39: #{tpu_custom_call.1} parent=1 // pred_check_branch
      %72 = sbr.rel (0) target = $region41
    $region40: #{tpu_custom_call.1} parent=1 // pred_region
      %74 = dma.done [#allocation7], 512
    $region41: #{tpu_custom_call.1} parent=1 // pred_fallthru
      _
    %v75 = vld [vmem:[#allocation6] sm:$0xff]
    %v76 = vld [vmem:[#allocation6 + $0x8] sm:$0xff]
    %v77 = vld [vmem:[#allocation6 + $0x10] sm:$0xff]
    %v78 = vld [vmem:[#allocation6 + $0x18] sm:$0xff]
    %v79 = vld [vmem:[%s0] sm:$0xff]
    %v80 = vld [vmem:[%s0 + $0x8] sm:$0xff]
    %v81 = vld [vmem:[%s0 + $0x10] sm:$0xff]
    %v82 = vld [vmem:[%s0 + $0x18] sm:$0xff]
    %v83 = vld [vmem:[#allocation8] sm:$0xff]
    %v84 = vld [vmem:[#allocation8 + $0x8] sm:$0xff]
    %v85 = vld [vmem:[#allocation8 + $0x10] sm:$0xff]
    %v86 = vld [vmem:[#allocation8 + $0x18] sm:$0xff]
    %v87 = vld [vmem:[#allocation3] sm:$0xff]
    %v88 = vld [vmem:[#allocation3 + $0x8] sm:$0xff]
    %v89 = vld [vmem:[#allocation3 + $0x10] sm:$0xff]
    %v90 = vld [vmem:[#allocation3 + $0x18] sm:$0xff]
    %vm91 = vcmask 261120
    %v93 = vsel %vm91, %v83, 0
    %v96 = vsel %vm91, %v84, 0
    %v99 = vsel %vm91, %v85, 0
    %v102 = vsel %vm91, %v86, 0
    %104 = vmatpush.msra.mxu0 0.0
    %105 = vmatpush.msra.mxu0 0.0
    %106 = vmatpush.msra.mxu0 0.0
    %107 = vmatpush.msra.mxu0 0.0
    %108 = vmatpush.msra.mxu0 0.0
    %109 = vmatpush.msra.mxu0 0.0
    %110 = vmatpush.msra.mxu0 0.0
    %111 = vmatpush.msra.mxu0 0.0
    %112 = vmatpush.msra.mxu0 0.0
    %113 = vmatpush.msra.mxu0 0.0
    %114 = vmatpush.msra.mxu0 0.0
    %115 = vmatpush.msra.mxu0 0.0
    %116 = vmatpush.msra.mxu0 %v90
    %117 = vmatpush.msra.mxu0 %v89
    %118 = vmatpush.msra.mxu0 %v88
    %119 = vmatpush.msra.mxu0 %v87
    %120 = vmatmul.f32.gmra.mxu0 %v93
    %v121 = vpop.f32.mrf.mxu0
    %v122 = vadd.f32 0.0, %v121
    %123 = vmatmul.f32.gmra.mxu0 %v96
    %v124 = vpop.f32.mrf.mxu0
    %v125 = vadd.f32 0.0, %v124
    %126 = vmatmul.f32.gmra.mxu0 %v99
    %v127 = vpop.f32.mrf.mxu0
    %v128 = vadd.f32 0.0, %v127
    %129 = vmatmul.f32.gmra.mxu0 %v102
    %v130 = vpop.f32.mrf.mxu0
    %v131 = vadd.f32 0.0, %v130
    %132 = vdwg.mxu0
    %v134 = vsel %vm91, %v75, 0
    %v137 = vsel %vm91, %v76, 0
    %v140 = vsel %vm91, %v77, 0
    %v143 = vsel %vm91, %v78, 0
    %145 = vmatpush.msra.mxu0 0.0
    %146 = vmatpush.msra.mxu0 0.0
    %147 = vmatpush.msra.mxu0 0.0
    %148 = vmatpush.msra.mxu0 0.0
    %149 = vmatpush.msra.mxu0 0.0
    %150 = vmatpush.msra.mxu0 0.0
    %151 = vmatpush.msra.mxu0 0.0
    %152 = vmatpush.msra.mxu0 0.0
    %153 = vmatpush.msra.mxu0 0.0
    %154 = vmatpush.msra.mxu0 0.0
    %155 = vmatpush.msra.mxu0 0.0
    %156 = vmatpush.msra.mxu0 0.0
    %157 = vmatpush.msra.mxu0 %v82
    %158 = vmatpush.msra.mxu0 %v81
    %159 = vmatpush.msra.mxu0 %v80
    %160 = vmatpush.msra.mxu0 %v79
    %161 = vmatmul.f32.gmra.mxu0 %v134
    %v162 = vpop.f32.mrf.mxu0
    %v163 = vadd.f32 %v122, %v162
    %164 = vmatmul.f32.gmra.mxu0 %v137
    %v165 = vpop.f32.mrf.mxu0
    %v166 = vadd.f32 %v125, %v165
    %167 = vmatmul.f32.gmra.mxu0 %v140
    %v168 = vpop.f32.mrf.mxu0
    %v169 = vadd.f32 %v128, %v168
    %170 = vmatmul.f32.gmra.mxu0 %v143
    %v171 = vpop.f32.mrf.mxu0
    %v172 = vadd.f32 %v131, %v171
    %173 = vdwg.mxu0
    %v174 = vld [vmem:[%s4] sm:$0xff]
    %v175 = vld [vmem:[%s4 + $0x8] sm:$0xff]
    %v176 = vld [vmem:[%s4 + $0x10] sm:$0xff]
    %v177 = vld [vmem:[%s4 + $0x18] sm:$0xff]
    %179 = vset.pattern.permute.xlu0 0
    %180 = vperm.xlu0 %179, %v174
    %v181 = vpop.permute.xlu0 %180
    %184 = vset.pattern.permute.xlu0 0
    %185 = vperm.xlu0 %184, %v175
    %v186 = vpop.permute.xlu0 %185
    %189 = vset.pattern.permute.xlu0 0
    %190 = vperm.xlu0 %189, %v176
    %v191 = vpop.permute.xlu0 %190
    %194 = vset.pattern.permute.xlu0 0
    %195 = vperm.xlu0 %194, %v177
    %v196 = vpop.permute.xlu0 %195
    %v198 = vadd.f32 %v163, %v181
    %v199 = vadd.f32 %v166, %v186
    %v200 = vadd.f32 %v169, %v191
    %v201 = vadd.f32 %v172, %v196
    %v202 = vmax.f32 %v198, 0.0
    %v203 = vmax.f32 %v199, 0.0
    %v204 = vmax.f32 %v200, 0.0
    %v205 = vmax.f32 %v201, 0.0
    %v206 = vld [vmem:[%s5] sm:$0x1]
    %s207 = sld [smem:[#allocation2]]
    %v208 = vstv %s207
    %v210 = vsel %vm91, %v206, 0
    %212 = vmatpush.msra.mxu0 0.0
    %213 = vmatpush.msra.mxu0 0.0
    %214 = vmatpush.msra.mxu0 0.0
    %215 = vmatpush.msra.mxu0 0.0
    %216 = vmatpush.msra.mxu0 0.0
    %217 = vmatpush.msra.mxu0 0.0
    %218 = vmatpush.msra.mxu0 0.0
    %219 = vmatpush.msra.mxu0 0.0
    %220 = vmatpush.msra.mxu0 0.0
    %221 = vmatpush.msra.mxu0 0.0
    %222 = vmatpush.msra.mxu0 0.0
    %223 = vmatpush.msra.mxu0 0.0
    %224 = vmatpush.msra.mxu0 %v205
    %225 = vmatpush.msra.mxu0 %v204
    %226 = vmatpush.msra.mxu0 %v203
    %227 = vmatpush.msra.mxu0 %v202
    %228 = vmatmul.f32.gmra.mxu0 %v210
    %v229 = vpop.f32.mrf.mxu0
    %v230 = vadd.f32 %v208, %v229
    %231 = vdwg.mxu0
    %232 = vst [vmem:[#allocation9] sm:$0x1] %v230
    // Predicated region
    $region42: #{tpu_custom_call.1} parent=1 // pred_check
      _
    $region43: #{tpu_custom_call.1} parent=1 // pred_check_branch
      %234 = sbr.rel (0) target = $region45
    $region44: #{tpu_custom_call.1} parent=1 // pred_region
      %236 = vsyncadd [#allocation5], 0
      %s238 = sshll.u32 [#allocation9], 4
      %s239 = int_to_ptr.vmem [resolvable:$true] %s238
      %s240 = sshll.u32 %s7, 4
      %s241 = int_to_ptr.hbm [resolvable:$true] %s240
      %243 = dma.vmem_to_hbm [thread:$0]  %s239, 16, %s241, [#allocation5]
    $region45: #{tpu_custom_call.1} parent=1 // pred_fallthru
      _
    // Predicated region
    $region46: #{tpu_custom_call.1} parent=1 // pred_check
      _
    $region47: #{tpu_custom_call.1} parent=1 // pred_check_branch
      %245 = sbr.rel (0) target = $region49
    $region48: #{tpu_custom_call.1} parent=1 // pred_region
      %247 = dma.done [#allocation5], 16
    $region49: #{tpu_custom_call.1} parent=1 // pred_fallthru
      _
    %248 = vsyncpa [#allocation4], 1
    %249 = vsyncpa [#allocation7], 1
    %250 = vsyncpa [#allocation5], 1

</llo_original>
